<compile_context>
chip_gen: v5e
topology: v5e:2x2
jax: 0.10.0
libtpu: 0.0.40
codegen_flags: <defaults>
</compile_context>

<pallas_src>
import functools

import jax
import jax.numpy as jnp
from jax import lax
from jax.experimental import pallas as pl
from jax.experimental.pallas import tpu as pltpu

_LANES = 128


def _round_up(x, m):
    return ((x + m - 1) // m) * m


def _focal_loss_kernel(x_ref, t_ref, out_ref, acc_ref, *,
                       alpha, gamma, logits, n_elems, tile_rows):
    c = pl.program_id(0)          # core-split axis ("parallel")
    i = pl.program_id(1)          # streaming axis ("arbitrary")
    steps = pl.num_programs(1)

    @pl.when(i == 0)
    def _():
        acc_ref[...] = jnp.zeros_like(acc_ref)

    x = x_ref[...].astype(jnp.float32)
    t = t_ref[...].astype(jnp.float32)

    if logits:
        # binary_cross_entropy_with_logits (stable form)
        bce = jnp.maximum(x, 0.0) - x * t + jnp.log1p(jnp.exp(-jnp.abs(x)))
    else:
        # binary_cross_entropy: PyTorch clamps the log terms at -100
        log_p = jnp.maximum(jnp.log(x), -100.0)
        log_1mp = jnp.maximum(jnp.log(1.0 - x), -100.0)
        bce = -(t * log_p + (1.0 - t) * log_1mp)

    pt = jnp.exp(-bce)
    d = 1.0 - pt
    if float(gamma) == float(int(gamma)) and 0 <= int(gamma) <= 8:
        # integer gamma: VPU multiplies instead of exp/log pow on the EUP
        w = jnp.ones_like(d)
        for _ in range(int(gamma)):
            w = w * d
    else:
        w = d ** gamma
    f_loss = alpha * w * bce

    # In-kernel validity mask for the zero-padded tail (no mask stream from HBM).
    row_ids = lax.broadcasted_iota(jnp.int32, f_loss.shape, 0)
    lane_ids = lax.broadcasted_iota(jnp.int32, f_loss.shape, 1)
    base = (c * steps + i) * (tile_rows * _LANES)
    flat_idx = base + row_ids * _LANES + lane_ids
    f_loss = jnp.where(flat_idx < n_elems, f_loss, 0.0)

    acc_ref[...] += f_loss

    @pl.when(i == steps - 1)
    def _():
        # Collapse the (tile_rows, 128) accumulator to one lane-dense (8, 128)
        # partial-sum slab per core (pure VPU adds); wrapper finishes the mean.
        a = acc_ref[...].reshape(tile_rows // 8, 8, _LANES)
        out_ref[...] = jnp.sum(a, axis=0)


def focal_loss(inputs, targets, *, alpha=1.0, gamma=2.0, logits=False,
               tile_rows=1024, num_cores=2):
    """Mean focal loss (reduce=True path of the PyTorch module)."""
    assert inputs.shape == targets.shape
    n_elems = int(inputs.size)

    x = jnp.ravel(inputs)          # keep native dtype in HBM
    t = jnpath = jnp.ravel(targets)

    def _sublane(dt):
        return max(8, 32 // jnp.dtype(dt).itemsize)
    sublane = max(_sublane(x.dtype), _sublane(t.dtype))

    rows_min = pl.cdiv(n_elems, _LANES)
    eff_rows = min(_round_up(tile_rows, sublane), _round_up(rows_min, sublane))
    total_rows = _round_up(rows_min, eff_rows * num_cores)
    steps = total_rows // (eff_rows * num_cores)

    padded = total_rows * _LANES
    if padded != n_elems:
        # zero padding is safe: the in-kernel iota mask zeroes its contribution
        x = jnp.pad(x, (0, padded - n_elems))
        t = jnp.pad(t, (0, padded - n_elems))
    x = x.reshape(total_rows, _LANES)
    t = t.reshape(total_rows, _LANES)

    tile_spec = pl.BlockSpec((eff_rows, _LANES),
                             lambda c, i: (c * steps + i, 0))

    kernel = functools.partial(
        _focal_loss_kernel,
        alpha=float(alpha),
        gamma=float(gamma),
        logits=bool(logits),
        n_elems=n_elems,
        tile_rows=eff_rows,
    )

    partials = pl.pallas_call(
        kernel,
        out_shape=jax.ShapeDtypeStruct((num_cores * 8, _LANES), jnp.float32),
        grid_spec=pltpu.PrefetchScalarGridSpec(
            num_scalar_prefetch=0,
            grid=(num_cores, steps),
            in_specs=[tile_spec, tile_spec],
            out_specs=pl.BlockSpec((8, _LANES), lambda c, i: (c, 0)),
            scratch_shapes=[pltpu.VMEM((eff_rows, _LANES), jnp.float32)],
        ),
        compiler_params=pltpu.CompilerParams(
            dimension_semantics=("parallel", "arbitrary")),
    )(x, t)

    return jnp.sum(partials) / jnp.float32(n_elems)


def _focal_loss_ref(inputs, targets, *, alpha=1.0, gamma=2.0):
    p = inputs.astype(jnp.float32)
    t = targets.astype(jnp.float32)
    log_p = jnp.maximum(jnp.log(p), -100.0)
    log_1mp = jnp.maximum(jnp.log(1.0 - p), -100.0)
    bce = -(t * log_p + (1.0 - t) * log_1mp)
    pt = jnp.exp(-bce)
    return jnp.mean(alpha * (1.0 - pt) ** gamma * bce)


if __name__ == "__main__":
    key = jax.random.PRNGKey(0)
    k1, k2 = jax.random.split(key)
    # inputs are probabilities (logits=False default of the module)
    x = jax.random.uniform(k1, (2, 4, 16, 16), jnp.float32,
                           minval=0.01, maxval=0.99)
    # binary targets
    tgt = (jax.random.uniform(k2, (2, 4, 16, 16)) > 0.5).astype(jnp.float32)

    out = focal_loss(x, tgt)
    out = jax.block_until_ready(out)

    ref = _focal_loss_ref(x, tgt)
    assert jnp.allclose(out, ref, rtol=1e-5, atol=1e-6), (out, ref)
    print("KERNEL_OK")
</pallas_src>

<mosaic_0001>
module attributes {stable_mosaic.version = 11 : i64} {
  func.func @_focal_loss_kernel(%arg0: i32, %arg1: i32, %arg2: memref<16x128xf32, #tpu.memory_space<vmem>>, %arg3: memref<16x128xf32, #tpu.memory_space<vmem>>, %arg4: memref<8x128xf32, #tpu.memory_space<vmem>>, %arg5: memref<16x128xf32, #tpu.memory_space<vmem>>) attributes {dimension_semantics = [#tpu.dimension_semantics<parallel>, #tpu.dimension_semantics<arbitrary>], iteration_bounds = array<i64: 2, 1>, scalar_prefetch = 0 : i64, scratch_operands = 1 : i64, tpu.core_type = #tpu.core_type<tc>, window_params = [{transform_indices = @transform_0, window_bounds = array<i64: 16, 128>}, {transform_indices = @transform_1, window_bounds = array<i64: 16, 128>}, {transform_indices = @transform_2, window_bounds = array<i64: 8, 128>}]} {
    %c0_i32 = arith.constant 0 : i32
    %0 = arith.cmpi eq, %arg1, %c0_i32 : i32
    %1 = arith.extui %0 : i1 to i32
    %c0_i32_0 = arith.constant 0 : i32
    %2 = arith.cmpi ne, %1, %c0_i32_0 : i32
    scf.if %2 {
      %cst_20 = arith.constant 0.000000e+00 : f32
      %51 = vector.broadcast %cst_20 : f32 to vector<16x128xf32>
      %c0_21 = arith.constant 0 : index
      %c0_22 = arith.constant 0 : index
      %52 = vector.load %arg5[%c0_21, %c0_22] : memref<16x128xf32, #tpu.memory_space<vmem>>, vector<16x128xf32>
      tpu.vector_store %arg5[%c0_21, %c0_22], %51 {strides = array<i32>} : memref<16x128xf32, #tpu.memory_space<vmem>>, vector<16x128xf32>,
    } else {
    }
    %c0 = arith.constant 0 : index
    %c0_1 = arith.constant 0 : index
    %3 = vector.load %arg2[%c0, %c0_1] : memref<16x128xf32, #tpu.memory_space<vmem>>, vector<16x128xf32>
    %c0_2 = arith.constant 0 : index
    %c0_3 = arith.constant 0 : index
    %4 = vector.load %arg3[%c0_2, %c0_3] : memref<16x128xf32, #tpu.memory_space<vmem>>, vector<16x128xf32>
    %5 = math.log %3 : vector<16x128xf32>
    %cst = arith.constant -1.000000e+02 : f32
    %6 = vector.broadcast %cst : f32 to vector<16x128xf32>
    %7 = arith.maximumf %5, %6 : vector<16x128xf32>
    %cst_4 = arith.constant 1.000000e+00 : f32
    %8 = vector.broadcast %cst_4 : f32 to vector<16x128xf32>
    %9 = arith.subf %8, %3 : vector<16x128xf32>
    %10 = math.log %9 : vector<16x128xf32>
    %cst_5 = arith.constant -1.000000e+02 : f32
    %11 = vector.broadcast %cst_5 : f32 to vector<16x128xf32>
    %12 = arith.maximumf %10, %11 : vector<16x128xf32>
    %13 = arith.mulf %4, %7 : vector<16x128xf32>
    %cst_6 = arith.constant 1.000000e+00 : f32
    %14 = vector.broadcast %cst_6 : f32 to vector<16x128xf32>
    %15 = arith.subf %14, %4 : vector<16x128xf32>
    %16 = arith.mulf %15, %12 : vector<16x128xf32>
    %17 = arith.addf %13, %16 : vector<16x128xf32>
    %cst_7 = arith.constant 0.000000e+00 : f32
    %18 = vector.broadcast %cst_7 : f32 to vector<16x128xf32>
    %19 = arith.subf %18, %17 : vector<16x128xf32>
    %cst_8 = arith.constant 0.000000e+00 : f32
    %20 = vector.broadcast %cst_8 : f32 to vector<16x128xf32>
    %21 = arith.subf %20, %19 : vector<16x128xf32>
    %22 = math.exp %21 : vector<16x128xf32>
    %cst_9 = arith.constant 1.000000e+00 : f32
    %23 = vector.broadcast %cst_9 : f32 to vector<16x128xf32>
    %24 = arith.subf %23, %22 : vector<16x128xf32>
    %cst_10 = arith.constant 1.000000e+00 : f32
    %25 = vector.broadcast %cst_10 : f32 to vector<16x128xf32>
    %26 = arith.mulf %25, %24 : vector<16x128xf32>
    %27 = arith.mulf %26, %24 : vector<16x128xf32>
    %cst_11 = arith.constant 1.000000e+00 : f32
    %28 = vector.broadcast %cst_11 : f32 to vector<16x128xf32>
    %29 = arith.mulf %28, %27 : vector<16x128xf32>
    %30 = arith.mulf %29, %19 : vector<16x128xf32>
    %31 = tpu.iota {dimensions = array<i32: 0>} : vector<16x128xi32>
    %32 = tpu.iota {dimensions = array<i32: 1>} : vector<16x128xi32>
    %c1_i32 = arith.constant 1 : i32
    %33 = arith.muli %arg0, %c1_i32 : i32
    %34 = arith.addi %33, %arg1 : i32
    %c2048_i32 = arith.constant 2048 : i32
    %35 = arith.muli %34, %c2048_i32 : i32
    %c128_i32 = arith.constant 128 : i32
    %36 = vector.broadcast %c128_i32 : i32 to vector<16x128xi32>
    %37 = arith.muli %31, %36 : vector<16x128xi32>
    %38 = vector.broadcast %35 : i32 to vector<16x128xi32>
    %39 = arith.addi %38, %37 : vector<16x128xi32>
    %40 = arith.addi %39, %32 : vector<16x128xi32>
    %c2048_i32_12 = arith.constant 2048 : i32
    %41 = vector.broadcast %c2048_i32_12 : i32 to vector<16x128xi32>
    %42 = arith.cmpi slt, %40, %41 : vector<16x128xi32>
    %cst_13 = arith.constant 0.000000e+00 : f32
    %43 = vector.broadcast %cst_13 : f32 to vector<16x128xf32>
    %44 = arith.select %42, %30, %43 : vector<16x128xi1>, vector<16x128xf32>
    %c0_14 = arith.constant 0 : index
    %c0_15 = arith.constant 0 : index
    %45 = vector.load %arg5[%c0_14, %c0_15] : memref<16x128xf32, #tpu.memory_space<vmem>>, vector<16x128xf32>
    %46 = arith.addf %45, %44 : vector<16x128xf32>
    %c0_16 = arith.constant 0 : index
    %c0_17 = arith.constant 0 : index
    %47 = vector.load %arg5[%c0_16, %c0_17] : memref<16x128xf32, #tpu.memory_space<vmem>>, vector<16x128xf32>
    tpu.vector_store %arg5[%c0_16, %c0_17], %46 {strides = array<i32>} : memref<16x128xf32, #tpu.memory_space<vmem>>, vector<16x128xf32>,
    %c0_i32_18 = arith.constant 0 : i32
    %48 = arith.cmpi eq, %arg1, %c0_i32_18 : i32
    %49 = arith.extui %48 : i1 to i32
    %c0_i32_19 = arith.constant 0 : i32
    %50 = arith.cmpi ne, %49, %c0_i32_19 : i32
    scf.if %50 {
      %c0_20 = arith.constant 0 : index
      %c0_21 = arith.constant 0 : index
      %51 = vector.load %arg5[%c0_20, %c0_21] : memref<16x128xf32, #tpu.memory_space<vmem>>, vector<16x128xf32>
      %52 = vector.shape_cast %51 : vector<16x128xf32> to vector<2x8x128xf32>
      %cst_22 = arith.constant dense<0.000000e+00> : vector<8x128xf32>
      %53 = vector.multi_reduction <add>, %52, %cst_22 [0] : vector<2x8x128xf32> to vector<8x128xf32>
      %c0_23 = arith.constant 0 : index
      %c0_24 = arith.constant 0 : index
      %54 = vector.load %arg4[%c0_23, %c0_24] : memref<8x128xf32, #tpu.memory_space<vmem>>, vector<8x128xf32>
      tpu.vector_store %arg4[%c0_23, %c0_24], %53 {strides = array<i32>} : memref<8x128xf32, #tpu.memory_space<vmem>>, vector<8x128xf32>,
    } else {
    }
    return
  }
  func.func @transform_0(%arg0: i32, %arg1: i32) -> (i32, i32) {
    %c1_i32 = arith.constant 1 : i32
    %0 = arith.muli %arg0, %c1_i32 : i32
    %1 = arith.addi %0, %arg1 : i32
    %c0_i32 = arith.constant 0 : i32
    %c0_i32_0 = arith.constant 0 : i32
    return %1, %c0_i32 : i32, i32
  }
  func.func @transform_1(%arg0: i32, %arg1: i32) -> (i32, i32) {
    %c1_i32 = arith.constant 1 : i32
    %0 = arith.muli %arg0, %c1_i32 : i32
    %1 = arith.addi %0, %arg1 : i32
    %c0_i32 = arith.constant 0 : i32
    %c0_i32_0 = arith.constant 0 : i32
    return %1, %c0_i32 : i32, i32
  }
  func.func @transform_2(%arg0: i32, %arg1: i32) -> (i32, i32) {
    %c0_i32 = arith.constant 0 : i32
    %c0_i32_0 = arith.constant 0 : i32
    return %arg0, %c0_i32 : i32, i32
  }
}

</mosaic_0001>

<llo_original>
// kernel: tpu_custom_call.1
$region0: #{tpu_custom_call.1}
  #allocation0 [shape = 'u32[]', space=smem, size = 0x4, offset = 0x4, fixed_abs, tag = 'smem constant byte address 0x4 - core index']
  #allocation1 [shape = 'u32[72,128]{1,0:T(1,128)}', space=vmem, size = 0x9000, scoped, tag = 'internal scratch']
  #allocation2 [shape = 'f32[16,128]{1,0:T(8,128)}', space=vmem, size = 0x2000, scoped, tag = 'scratch operand']
  %s0 = inlined_call_operand.hbm [shape: f32[32,128], index: 0, kind: input, shape index: {}]
  %s1 = inlined_call_operand.hbm [shape: f32[32,128], index: 1, kind: input, shape index: {}]
  %s2 = inlined_call_operand.hbm [shape: f32[16,128], index: 2, kind: output, shape index: {}]
  %s3 = sld [smem:[#allocation0]]
  $region57: #{tpu_custom_call.1} parent=0
    _
  %s5 = ssub.s32 1, %s3
  %s6 = scalar_select 0, %s5, %s3
  $region1: #{tpu_custom_call.1} parent=0
    #allocation3 [shape = 'u8[16384]{0}', space=vmem, size = 0x4000, scoped, tag = 'input window, operand 0']
    #allocation4 [shape = 's32[2]{0}', space=sflag, size = 0x8, scoped, tag = 'scoped memory for tpu_custom_call.1']
    #allocation5 [shape = 's32[2]{0}', space=sflag, size = 0x8, scoped, tag = 'scoped memory for tpu_custom_call.1']
    #allocation6 [shape = 'u8[16384]{0}', space=vmem, size = 0x4000, scoped, tag = 'input window, operand 1']
    #allocation7 [shape = 's32[2]{0}', space=sflag, size = 0x8, scoped, tag = 'scoped memory for tpu_custom_call.1']
    #allocation8 [shape = 'u8[8192]{0}', space=vmem, size = 0x2000, scoped, tag = 'output window, operand 0']
    %7 = vsyncpa [#allocation4], 0
    %s8 = scalar_lea.sflag [#allocation4], 1
    %9 = vsyncpa %s8, 0
    %10 = vsyncpa [#allocation7], 0
    %s11 = scalar_lea.sflag [#allocation7], 1
    %12 = vsyncpa %s11, 0
    %13 = vsyncpa [#allocation5], 0
    %s14 = scalar_lea.sflag [#allocation5], 1
    %15 = vsyncpa %s14, 0
    loop: start=0, step=1, limit=4
    $region2: #{tpu_custom_call.1} parent=1 // loop_pre_header
      _
    $region3: #{tpu_custom_call.1} parent=1 // loop_header
      %s17 = sphi 0, %s21
      %p18 = scmp.ge.s32.totalorder %s17, 4
      %s24 = sphi 0, %s36
      %s25 = sphi 0, %s32
      %s26 = sphi 0, %s24
      %s27 = sphi 0, %s25
      %s28 = sphi 0, %s26
      %s29 = sphi 0, %s27
      %s41 = sphi 0, %s43
      %s44 = sphi 0, %s41
      %s45 = sphi 0, %s44
      %s61 = sphi 0, %s45
      %s69 = sphi 0, %s71
      %s72 = sphi 0, %s69
      %s73 = sphi 0, %s72
      %s89 = sphi 0, %s73
      %s95 = sphi 0, %s97
      %s98 = sphi 0, %s95
      %s99 = sphi 0, %s98
      %s115 = sphi 0, %s99
    $region4: #{tpu_custom_call.1} parent=1 // loop_header_branch
      %20 = sbr.rel (%p18) target = $region8
    $region5: #{tpu_custom_call.1} parent=1 // loop_body
      %s22 = ssub.s32 %s17, 1
      %s23 = ssub.s32 %s17, 2
      %s30 = sadd.s32 1, %s25
      %p31 = scmp.ge.s32.totalorder %s30, 1
      %s32 = scalar_select %p31, 0, %s30
      %s33 = sadd.s32 1, %s24
      %s34 = scalar_select %p31, %s33, %s24
      %p35 = scmp.ge.s32.totalorder %s34, 2
      %s36 = scalar_select %p35, 0, %s34
      %s37 = sadd.s32 %s24, %s25
      %s38 = sadd.s32 %s36, %s32
      %s39 = ssub.s32 %s37, %s38
      %p40 = scmp.eq.s32.totalorder %s39, 0
      %s42 = sadd.s32 %s41, 1
      %s43 = scalar_select %p40, %s41, %s42
      %p46 = pneg %p40
      %p47 = scmp.eq.s32.totalorder %s17, 1
      %p48 = por %p46, %p47
      %p49 = scmp.ne.s32.totalorder %s41, %s44
      %p50 = scmp.eq.s32.totalorder %s17, 0
      %p51 = por %p49, %p50
      %p52 = scmp.ne.s32.totalorder %s41, %s44
      %p53 = scmp.eq.s32.totalorder %s22, 1
      %p54 = por %p52, %p53
      %p55 = scmp.ne.s32.totalorder %s44, %s45
      %p56 = scmp.eq.s32.totalorder %s22, 0
      %p57 = por %p55, %p56
      %p58 = scmp.ne.s32.totalorder %s44, %s45
      %p59 = scmp.eq.s32.totalorder %s23, 1
      %p60 = por %p58, %p59
      %p62 = scmp.ne.s32.totalorder %s45, %s61
      %p63 = scmp.eq.s32.totalorder %s23, 0
      %p64 = por %p62, %p63
      %s65 = sadd.s32 %s24, %s25
      %s66 = sadd.s32 %s36, %s32
      %s67 = ssub.s32 %s65, %s66
      %p68 = scmp.eq.s32.totalorder %s67, 0
      %s70 = sadd.s32 %s69, 1
      %s71 = scalar_select %p68, %s69, %s70
      %p74 = pneg %p68
      %p75 = scmp.eq.s32.totalorder %s17, 1
      %p76 = por %p74, %p75
      %p77 = scmp.ne.s32.totalorder %s69, %s72
      %p78 = scmp.eq.s32.totalorder %s17, 0
      %p79 = por %p77, %p78
      %p80 = scmp.ne.s32.totalorder %s69, %s72
      %p81 = scmp.eq.s32.totalorder %s22, 1
      %p82 = por %p80, %p81
      %p83 = scmp.ne.s32.totalorder %s72, %s73
      %p84 = scmp.eq.s32.totalorder %s22, 0
      %p85 = por %p83, %p84
      %p86 = scmp.ne.s32.totalorder %s72, %s73
      %p87 = scmp.eq.s32.totalorder %s23, 1
      %p88 = por %p86, %p87
      %p90 = scmp.ne.s32.totalorder %s73, %s89
      %p91 = scmp.eq.s32.totalorder %s23, 0
      %p92 = por %p90, %p91
      %s93 = ssub.s32 %s24, %s36
      %p94 = scmp.eq.s32.totalorder %s93, 0
      %s96 = sadd.s32 %s95, 1
      %s97 = scalar_select %p94, %s95, %s96
      %p100 = pneg %p94
      %p101 = scmp.eq.s32.totalorder %s17, 1
      %p102 = por %p100, %p101
      %p103 = scmp.ne.s32.totalorder %s95, %s98
      %p104 = scmp.eq.s32.totalorder %s17, 0
      %p105 = por %p103, %p104
      %p106 = scmp.ne.s32.totalorder %s95, %s98
      %p107 = scmp.eq.s32.totalorder %s22, 1
      %p108 = por %p106, %p107
      %p109 = scmp.ne.s32.totalorder %s98, %s99
      %p110 = scmp.eq.s32.totalorder %s22, 0
      %p111 = por %p109, %p110
      %p112 = scmp.ne.s32.totalorder %s98, %s99
      %p113 = scmp.eq.s32.totalorder %s23, 1
      %p114 = por %p112, %p113
      %p116 = scmp.ne.s32.totalorder %s99, %s115
      %p117 = scmp.eq.s32.totalorder %s23, 0
      %p118 = por %p116, %p117
      %p119 = scmp.le.s32.totalorder 1, %s17
      %p120 = scmp.lt.s32.totalorder %s17, 3
      %p121 = pnand %p119, %p120
      %p122 = pneg %p121
      // Predicated region
      $region9: #{tpu_custom_call.1} parent=5 // pred_check
        _
      $region10: #{tpu_custom_call.1} parent=5 // pred_check_branch
        %124 = sbr.rel (%p121) target = $region12
      $region11: #{tpu_custom_call.1} parent=5 // pred_region
        %s125 = ssub.s32 %s17, 1
      $region12: #{tpu_custom_call.1} parent=5 // pred_fallthru
        _
      %p126 = scmp.lt.s32.totalorder %s17, 2
      // Predicated region
      $region13: #{tpu_custom_call.1} parent=5 // pred_check
        %p127 = pneg %p126
      $region14: #{tpu_custom_call.1} parent=5 // pred_check_branch
        %129 = sbr.rel (%p127) target = $region16
      $region15: #{tpu_custom_call.1} parent=5 // pred_region
        // Predicated region
        $region17: #{tpu_custom_call.1} parent=15 // pred_check
          %p130 = pneg %p51
        $region18: #{tpu_custom_call.1} parent=15 // pred_check_branch
          %132 = sbr.rel (%p130) target = $region20
        $region19: #{tpu_custom_call.1} parent=15 // pred_region
          %s133 = sand.u32 %s41, 1
          %s134 = scalar_lea.sflag [#allocation4], %s133
          %s135 = sand.u32 %s41, 1
          %s136 = smul.addr %s135, 16
          %s137 = scalar_lea.vmem [#allocation3], %s136
          %s138 = sadd.s32 %s24, %s25
          %s139 = smul.u32 2, %s138
          %141 = vsyncadd %s134, 0
          %s142 = smul.addr %s139, 8
          %s143 = scalar_lea.hbm %s0, %s142
          %s144 = sshll.u32 %s143, 4
          %s145 = int_to_ptr.hbm [resolvable:$true] %s144
          %s146 = sshll.u32 %s137, 4
          %s147 = int_to_ptr.vmem [resolvable:$true] %s146
          %152 = dma.hbm_to_vmem [thread:$0]  %s145, 256, %s147, %s134, 128, 128, 8
        $region20: #{tpu_custom_call.1} parent=15 // pred_fallthru
          _
        // Predicated region
        $region21: #{tpu_custom_call.1} parent=15 // pred_check
          %p153 = pneg %p79
        $region22: #{tpu_custom_call.1} parent=15 // pred_check_branch
          %155 = sbr.rel (%p153) target = $region24
        $region23: #{tpu_custom_call.1} parent=15 // pred_region
          %s156 = sand.u32 %s69, 1
          %s157 = scalar_lea.sflag [#allocation7], %s156
          %s158 = sand.u32 %s69, 1
          %s159 = smul.addr %s158, 16
          %s160 = scalar_lea.vmem [#allocation6], %s159
          %s161 = sadd.s32 %s24, %s25
          %s162 = smul.u32 2, %s161
          %164 = vsyncadd %s157, 0
          %s165 = smul.addr %s162, 8
          %s166 = scalar_lea.hbm %s1, %s165
          %s167 = sshll.u32 %s166, 4
          %s168 = int_to_ptr.hbm [resolvable:$true] %s167
          %s169 = sshll.u32 %s160, 4
          %s170 = int_to_ptr.vmem [resolvable:$true] %s169
          %175 = dma.hbm_to_vmem [thread:$0]  %s168, 256, %s170, %s157, 128, 128, 8
        $region24: #{tpu_custom_call.1} parent=15 // pred_fallthru
          _
      $region16: #{tpu_custom_call.1} parent=5 // pred_fallthru
        _
      %p176 = scmp.le.s32.totalorder 1, %s17
      %p177 = scmp.lt.s32.totalorder %s17, 3
      %p178 = pnand %p176, %p177
      %p179 = pneg %p178
      // Predicated region
      $region25: #{tpu_custom_call.1} parent=5 // pred_check
        _
      $region26: #{tpu_custom_call.1} parent=5 // pred_check_branch
        %181 = sbr.rel (%p178) target = $region28
      $region27: #{tpu_custom_call.1} parent=5 // pred_region
        %s182 = ssub.s32 %s17, 1
        %s183 = sand.u32 %s44, 1
        %s184 = scalar_lea.sflag [#allocation4], %s183
        %s185 = sand.u32 %s44, 1
        %s186 = smul.addr %s185, 16
        %s187 = scalar_lea.vmem [#allocation3], %s186
        // Predicated region
        $region29: #{tpu_custom_call.1} parent=27 // pred_check
          %p188 = pneg %p57
        $region30: #{tpu_custom_call.1} parent=27 // pred_check_branch
          %190 = sbr.rel (%p188) target = $region32
        $region31: #{tpu_custom_call.1} parent=27 // pred_region
          %192 = dma.done %s184, 256
        $region32: #{tpu_custom_call.1} parent=27 // pred_fallthru
          _
        %s193 = sand.u32 %s72, 1
        %s194 = scalar_lea.sflag [#allocation7], %s193
        %s195 = sand.u32 %s72, 1
        %s196 = smul.addr %s195, 16
        %s197 = scalar_lea.vmem [#allocation6], %s196
        // Predicated region
        $region33: #{tpu_custom_call.1} parent=27 // pred_check
          %p198 = pneg %p85
        $region34: #{tpu_custom_call.1} parent=27 // pred_check_branch
          %200 = sbr.rel (%p198) target = $region36
        $region35: #{tpu_custom_call.1} parent=27 // pred_region
          %202 = dma.done %s194, 256
        $region36: #{tpu_custom_call.1} parent=27 // pred_fallthru
          _
        %s203 = sand.u32 %s44, 1
        %s204 = scalar_lea.sflag [#allocation4], %s203
        %s205 = sand.u32 %s44, 1
        %s206 = smul.addr %s205, 16
        %s207 = scalar_lea.vmem [#allocation3], %s206
        %p208 = pneg %p57
        %p209 = pneg %p54
        %s210 = sand.u32 %s72, 1
        %s211 = scalar_lea.sflag [#allocation7], %s210
        %s212 = sand.u32 %s72, 1
        %s213 = smul.addr %s212, 16
        %s214 = scalar_lea.vmem [#allocation6], %s213
        %p215 = pneg %p85
        %p216 = pneg %p82
        %p217 = pneg %p111
        %p218 = pneg %p108
        %s219 = sand.u32 %s98, 1
        %s220 = scalar_lea.sflag [#allocation5], %s219
        %s221 = sand.u32 %s98, 1
        %s222 = smul.addr %s221, 8
        %s223 = scalar_lea.vmem [#allocation8], %s222
        %s224 = sadd.s32 %s26, %s27
        %s225 = smul.u32 2, %s224
        %s226 = sadd.s32 %s26, %s27
        %s227 = smul.u32 2, %s226
        %p228 = scmp.eq.s32.totalorder %s27, 0
        // Predicated region
        $region37: #{tpu_custom_call.1} parent=27 // pred_check
          %p229 = pneg %p228
        $region38: #{tpu_custom_call.1} parent=27 // pred_check_branch
          %231 = sbr.rel (%p229) target = $region40
        $region39: #{tpu_custom_call.1} parent=27 // pred_region
          %232 = vst [vmem:[#allocation2] sm:$0xff] 0.0
          %233 = vst [vmem:[#allocation2 + $0x8] sm:$0xff] 0.0
        $region40: #{tpu_custom_call.1} parent=27 // pred_fallthru
          _
        %v234 = vld [vmem:[%s187] sm:$0xff]
        %v235 = vld [vmem:[%s187 + $0x8] sm:$0xff]
        %v236 = vld [vmem:[%s197] sm:$0xff]
        %v237 = vld [vmem:[%s197 + $0x8] sm:$0xff]
        %v238 = vlog2.pop %v234
        %v239 = vmul.f32 %v238, 0.6931472
        %v240 = vlog2.pop %v235
        %v241 = vmul.f32 %v240, 0.6931472
        %v242 = vmax.f32 %v239, -100.0
        %v243 = vmax.f32 %v241, -100.0
        %v244 = vsub.f32 1.0, %v234
        %v245 = vsub.f32 1.0, %v235
        %v246 = vlog2.pop %v244
        %v247 = vmul.f32 %v246, 0.6931472
        %v248 = vlog2.pop %v245
        %v249 = vmul.f32 %v248, 0.6931472
        %v250 = vmax.f32 %v247, -100.0
        %v251 = vmax.f32 %v249, -100.0
        %v252 = vmul.f32 %v236, %v242
        %v253 = vmul.f32 %v237, %v243
        %v254 = vsub.f32 1.0, %v236
        %v255 = vsub.f32 1.0, %v237
        %v256 = vmul.f32 %v254, %v250
        %v257 = vmul.f32 %v255, %v251
        %v258 = vadd.f32 %v252, %v256
        %v259 = vadd.f32 %v253, %v257
        %v260 = vsub.f32 0.0, %v258
        %v261 = vsub.f32 0.0, %v259
        %v262 = vsub.f32 0.0, %v260
        %v263 = vsub.f32 0.0, %v261
        %v264 = vmul.f32 %v262, 1.442695
        %v265 = vpow.pop %v264
        %v266 = vmul.f32 %v263, 1.442695
        %v267 = vpow.pop %v266
        %v268 = vsub.f32 1.0, %v265
        %v269 = vsub.f32 1.0, %v267
        %v270 = vmul.f32 %v268, %v268
        %v271 = vmul.f32 %v269, %v269
        %v272 = vmul.f32 %v270, %v260
        %v273 = vmul.f32 %v271, %v261
        %v274 = vlaneseq
        %v275 = vshrl.u32 %v274, 7
        %v276 = vadd.s32 %v275, 8
        %v277 = vlaneseq
        %v278 = vand.u32 %v277, 127
        %s279 = sadd.s32 %s26, %s27
        %s280 = smul.u32 %s279, 2048
        %v281 = vmul.u32 %v275, 128
        %v282 = vmul.u32 %v276, 128
        %v283 = vstv %s280
        %v284 = vadd.s32 %v283, %v281
        %v285 = vadd.s32 %v283, %v282
        %v286 = vadd.s32 %v284, %v278
        %v287 = vadd.s32 %v285, %v278
        %vm288 = vcmp.lt.s32.totalorder %v286, 2048
        %vm289 = vcmp.lt.s32.totalorder %v287, 2048
        %v290 = vsel %vm288, %v272, 0.0
        %v291 = vsel %vm289, %v273, 0.0
        %v292 = vld [vmem:[#allocation2] sm:$0xff]
        %v293 = vld [vmem:[#allocation2 + $0x8] sm:$0xff]
        %v294 = vadd.f32 %v292, %v290
        %v295 = vadd.f32 %v293, %v291
        %296 = vst [vmem:[#allocation2] sm:$0xff] %v294
        %297 = vst [vmem:[#allocation2 + $0x8] sm:$0xff] %v295
        // Predicated region
        $region41: #{tpu_custom_call.1} parent=27 // pred_check
          %p298 = pneg %p228
        $region42: #{tpu_custom_call.1} parent=27 // pred_check_branch
          %300 = sbr.rel (%p298) target = $region44
        $region43: #{tpu_custom_call.1} parent=27 // pred_region
          %v301 = vld [vmem:[#allocation2] sm:$0xff]
          %v302 = vld [vmem:[#allocation2 + $0x8] sm:$0xff]
          %v303 = vadd.f32 %v301, %v302
          %304 = vst [vmem:[%s223] sm:$0xff] %v303
        $region44: #{tpu_custom_call.1} parent=27 // pred_fallthru
          _
        %s305 = sand.u32 %s98, 1
        %s306 = scalar_lea.sflag [#allocation5], %s305
        %s307 = sand.u32 %s98, 1
        %s308 = smul.addr %s307, 8
        %s309 = scalar_lea.vmem [#allocation8], %s308
        // Predicated region
        $region45: #{tpu_custom_call.1} parent=27 // pred_check
          %p310 = pneg %p108
        $region46: #{tpu_custom_call.1} parent=27 // pred_check_branch
          %312 = sbr.rel (%p310) target = $region48
        $region47: #{tpu_custom_call.1} parent=27 // pred_region
          %314 = vsyncadd %s306, 0
          %s315 = smul.addr %s26, 8
          %s316 = scalar_lea.hbm %s2, %s315
          %s318 = sshll.u32 %s309, 4
          %s319 = int_to_ptr.vmem [resolvable:$true] %s318
          %s320 = sshll.u32 %s316, 4
          %s321 = int_to_ptr.hbm [resolvable:$true] %s320
          %323 = dma.vmem_to_hbm [thread:$0]  %s319, 128, %s321, %s306
        $region48: #{tpu_custom_call.1} parent=27 // pred_fallthru
          _
      $region28: #{tpu_custom_call.1} parent=5 // pred_fallthru
        _
      %p324 = scmp.le.s32.totalorder 2, %s17
      // Predicated region
      $region49: #{tpu_custom_call.1} parent=5 // pred_check
        %p325 = pneg %p324
      $region50: #{tpu_custom_call.1} parent=5 // pred_check_branch
        %327 = sbr.rel (%p325) target = $region52
      $region51: #{tpu_custom_call.1} parent=5 // pred_region
        %s328 = ssub.s32 %s17, 2
        // Predicated region
        $region53: #{tpu_custom_call.1} parent=51 // pred_check
          %p329 = pneg %p114
        $region54: #{tpu_custom_call.1} parent=51 // pred_check_branch
          %331 = sbr.rel (%p329) target = $region56
        $region55: #{tpu_custom_call.1} parent=51 // pred_region
          %s332 = sand.u32 %s99, 1
          %s333 = scalar_lea.sflag [#allocation5], %s332
          %s334 = sand.u32 %s99, 1
          %s335 = smul.addr %s334, 8
          %s336 = scalar_lea.vmem [#allocation8], %s335
          %338 = dma.done %s333, 128
        $region56: #{tpu_custom_call.1} parent=51 // pred_fallthru
          _
      $region52: #{tpu_custom_call.1} parent=5 // pred_fallthru
        _
    $region6: #{tpu_custom_call.1} parent=1 // loop_footer
      %s21 = sadd.s32 1, %s17
    $region7: #{tpu_custom_call.1} parent=1 // loop_footer_branch
      %16 = sbr.rel target = $region3
    $region8: #{tpu_custom_call.1} parent=1 // loop_exit
      _
    %339 = vsyncpa [#allocation4], 1
    %s340 = scalar_lea.sflag [#allocation4], 1
    %341 = vsyncpa %s340, 1
    %342 = vsyncpa [#allocation7], 1
    %s343 = scalar_lea.sflag [#allocation7], 1
    %344 = vsyncpa %s343, 1
    %345 = vsyncpa [#allocation5], 1
    %s346 = scalar_lea.sflag [#allocation5], 1
    %347 = vsyncpa %s346, 1

</llo_original>
